<compile_context>
chip_gen: v5e
topology: v5e:2x2
jax: 0.10.0
libtpu: 0.0.40
codegen_flags: <defaults>
</compile_context>

<pallas_src>
import functools

import jax
import jax.numpy as jnp
import numpy as np
from jax.experimental import pallas as pl
from jax.experimental.pallas import tpu as pltpu

EPS = 1e-5      # eps of _wFMConv2dHelper
LANE = 128      # lane-alignment unit
MAX_BT = 16     # cap on batch rows per grid step (bounds static unroll)


def _round_up(x, m):
    return ((x + m - 1) // m) * m


def _vmem_ceiling_bytes():
    """Generation-aware VMEM request ceiling with headroom for compiler scratch."""
    cap = 64 << 20
    try:
        cap = int(getattr(pltpu.get_tpu_info(), "vmem_capacity_bytes", cap))
    except Exception:
        pass
    # ~20% headroom; never request the full physical VMEM (v7x: 64 MiB/TC).
    return max(32 << 20, min(int(cap * 0.8), cap - (8 << 20)))


# ----------------------------------------------------------------------------
# Pallas kernel: fused stage-1 (stride-1 closed-form fold) + stage-2 wFM.
# Per batch row:
#   G_mag[c, j] = cnt[j]*mag[c, j] + bias[c, j]        (fold closed form)
#   G_ang[c, j] = ang[c, j] * scl[c, j]
#   logit[o, l] = sum_{k,c} Wm[o, k*C+c] * log(G_mag[c, l+k] + EPS)   (ONE matmul)
#   angle[o, l] = sum_{k,c} Wa[o, k*C+c] * G_ang[c, l+k]              (ONE matmul)
#   real = exp(logit)*cos(angle),  imag = exp(logit)*sin(angle)
# ----------------------------------------------------------------------------
def _wfm_kernel(x_ref, aff_ref, w_ref, out_ref):
    bt = x_ref.shape[0]
    c, wpad = x_ref.shape[2], x_ref.shape[3]
    o_pad, l_pad = out_ref.shape[2], out_ref.shape[3]
    k_taps = w_ref.shape[2] // c

    cnt = aff_ref[0]        # (C, Wpad) fold multiplicity (0 outside valid region)
    bias = aff_ref[1]       # (C, Wpad) summed normalized magnitude taps
    scl = aff_ref[2]        # (C, Wpad) summed normalized angle taps
    w_mag = w_ref[0]        # (O_pad, K*C) fused over-C x over-K weights
    w_ang = w_ref[1]

    for bi in range(bt):                                   # small static unroll
        mag_row = cnt * x_ref[bi, 0] + bias                # fused stage-1 fold
        ang_row = scl * x_ref[bi, 1]
        log_mag = jnp.log(mag_row + EPS)                   # EUP: once per element

        # K lane-shifted copies stacked along the contraction dim -> (K*C, Lpad).
        mag_taps = [log_mag[:, :l_pad]]
        ang_taps = [ang_row[:, :l_pad]]
        for kt in range(1, k_taps):                        # tap shift on the XLU
            mag_taps.append(pltpu.roll(log_mag, wpad - kt, axis=1)[:, :l_pad])
            ang_taps.append(pltpu.roll(ang_row, wpad - kt, axis=1)[:, :l_pad])
        mag_stack = jnp.concatenate(mag_taps, axis=0)      # (K*C, Lpad)
        ang_stack = jnp.concatenate(ang_taps, axis=0)

        logit = jnp.dot(w_mag, mag_stack, preferred_element_type=jnp.float32)
        angle = jnp.dot(w_ang, ang_stack, preferred_element_type=jnp.float32)
        mag = jnp.exp(logit)                               # EUP
        out_ref[bi, 0] = mag * jnp.cos(angle)              # real, lane-dense store
        out_ref[bi, 1] = mag * jnp.sin(angle)              # imag


def _wfm_stage2_pallas(polar_p, affine, w_fused, bt, l_pad):
    """polar_p: (Bpad, 2, C, Wpad); affine: (3, C, Wpad); w_fused: (2, O_pad, K*C)."""
    b_pad, _, c, wpad = polar_p.shape
    _, o_pad, kc = w_fused.shape
    grid = (b_pad // bt,)

    # VMEM budget with real (8,128) tile padding, clamped to a generation-aware
    # ceiling (leaves headroom; raises v5e's 16 MiB scoped default).
    c8 = _round_up(c, 8)
    in_blk = bt * 2 * c8 * wpad * 4
    aff_blk = 3 * c8 * wpad * 4
    w_blk = 2 * o_pad * _round_up(kc, 128) * 4
    out_blk = bt * 2 * o_pad * l_pad * 4
    dbuf = 2 * (in_blk + aff_blk + w_blk + out_blk)        # double-buffered pipeline
    tmp = bt * (4 * c8 * wpad + 2 * _round_up(kc, 8) * l_pad + 6 * o_pad * l_pad) * 4
    vmem_limit = int(min(max(dbuf + tmp, 32 << 20), _vmem_ceiling_bytes()))

    return pl.pallas_call(
        _wfm_kernel,
        out_shape=jax.ShapeDtypeStruct((b_pad, 2, o_pad, l_pad), jnp.float32),
        grid_spec=pltpu.PrefetchScalarGridSpec(
            num_scalar_prefetch=0,
            grid=grid,
            in_specs=[pl.BlockSpec((bt, 2, c, wpad), lambda i: (i, 0, 0, 0)),
                      pl.BlockSpec((3, c, wpad), lambda i: (0, 0, 0)),
                      pl.BlockSpec((2, o_pad, kc), lambda i: (0, 0, 0))],
            out_specs=pl.BlockSpec((bt, 2, o_pad, l_pad), lambda i: (i, 0, 0, 0))),
        compiler_params=pltpu.CompilerParams(
            dimension_semantics=("parallel",),
            vmem_limit_bytes=vmem_limit),
    )(polar_p, affine, w_fused)


# ----------------------------------------------------------------------------
# Plain-JAX 1-D unfold / fold (nn.Unfold / nn.Fold with kernel (1, K)) — used by
# the reference and the stride != 1 fallback only.
# ----------------------------------------------------------------------------
def _unfold1d(x, k, stride, pad):
    b, c, w = x.shape
    xp = jnp.pad(x, ((0, 0), (0, 0), (pad, pad)))
    l = (w + 2 * pad - k) // stride + 1
    idx = jnp.arange(l)[:, None] * stride + jnp.arange(k)[None, :]   # (L, K)
    return xp[:, :, idx]


def _fold1d(patches, w, k, stride, pad):
    b, c, l, kk = patches.shape
    idx = jnp.arange(l)[:, None] * stride + jnp.arange(kk)[None, :]
    out = jnp.zeros((b, c, w + 2 * pad), patches.dtype)
    out = out.at[:, :, idx].add(patches)
    return out[:, :, pad:pad + w]


# ----------------------------------------------------------------------------
# Pure-JAX reference (mirrors the PyTorch module) for correctness checking
# ----------------------------------------------------------------------------
def wfm_conv1d_reference(x, params, kernel_size, stride=1, padding=0):
    b, c, w = x.shape
    k = kernel_size
    mag, ang = jnp.abs(x), jnp.angle(x)
    wm, wa = params["weight_matrix_mag"], params["weight_matrix_ang"]
    p_mag = _unfold1d(mag, k, stride, padding) + (wm ** 2 / jnp.sum(wm ** 2))[None, :, None, :]
    p_ang = _unfold1d(ang, k, stride, padding) * (wa / jnp.sum(wa ** 2))[None, :, None, :]
    fm = _fold1d(p_mag, w, k, stride, padding)
    fa = _fold1d(p_ang, w, k, stride, padding)
    tb_mag = _unfold1d(fm, k, stride, padding)
    tb_ang = _unfold1d(fa, k, stride, padding)
    a1, a2 = params["weight_matrix_ang1"], params["weight_matrix_ang2"]
    wmm1 = a1 ** 2 / jnp.sum(a1 ** 2, axis=1, keepdims=True)
    wmm2 = a2 ** 2 / jnp.sum(a2 ** 2, axis=1, keepdims=True)
    wma1 = a1 ** 2 / jnp.sum(a1 ** 2)
    wma2 = a2 ** 2 / jnp.sum(a2 ** 2)
    tmp_mag = jnp.sum(jnp.log(tb_mag + EPS) * wmm1[None, :, None, :], axis=3)  # (B,C,L)
    out_mag = jnp.exp(jnp.einsum("oc,bcl->bol", wmm2, tmp_mag))
    tmp_ang = jnp.sum(tb_ang * wma1[None, :, None, :], axis=3)
    out_ang = jnp.einsum("oc,bcl->bol", wma2, tmp_ang)
    return out_mag * jnp.cos(out_ang) + 1j * out_mag * jnp.sin(out_ang)


# ----------------------------------------------------------------------------
# wFMConv1d forward
# ----------------------------------------------------------------------------
def wfm_conv1d_forward(x, params, kernel_size, stride=1, padding=0):
    """x: complex64 (B, C, W). Returns complex64 (B, out_channels, L_out)."""
    b, c, w = x.shape
    k = kernel_size

    if stride != 1:
        # TODO(synk): Pallas fast path assumes stride == 1 (dense shifted-tap matmul
        # and closed-form fold); strided case falls back to the pure-JAX formulation.
        return wfm_conv1d_reference(x, params, kernel_size, stride, padding)

    l = (w + 2 * padding - k) // stride + 1
    o = params["weight_matrix_ang2"].shape[0]
    o_pad = _round_up(o, 8)

    mag = jnp.abs(x)
    ang = jnp.angle(x)

    # stage-1 normalized weights
    wm = params["weight_matrix_mag"]
    wa = params["weight_matrix_ang"]
    wm_norm = wm ** 2 / jnp.sum(wm ** 2)          # _normalize_weights_squared  (C, K)
    wa_norm = wa / jnp.sum(wa ** 2)               # _normalize_weights          (C, K)

    # stage-2 weights (_wFMConv2dHelper, weight_dropout = 0 / eval -> identity)
    a1 = params["weight_matrix_ang1"]             # (C, K)
    a2 = params["weight_matrix_ang2"]             # (O, C)
    wmm1 = a1 ** 2 / jnp.sum(a1 ** 2, axis=1, keepdims=True)   # _normalize_rows
    wmm2 = a2 ** 2 / jnp.sum(a2 ** 2, axis=1, keepdims=True)
    wma1 = a1 ** 2 / jnp.sum(a1 ** 2)                          # _normalize_weights_squared
    wma2 = a2 ** 2 / jnp.sum(a2 ** 2)

    # fused (over-C x over-K) weights flattened to (O, K*C), index = k*C + c,
    # zero-padded to O_pad sublanes and merged mag/ang -> (2, O_pad, K*C)
    w_mag = (wmm2[:, None, :] * jnp.transpose(wmm1)[None, :, :]).reshape(o, k * c)
    w_ang = (wma2[:, None, :] * jnp.transpose(wma1)[None, :, :]).reshape(o, k * c)
    w_fused = (jnp.zeros((2, o_pad, k * c), jnp.float32)
               .at[0, :o].set(w_mag.astype(jnp.float32))
               .at[1, :o].set(w_ang.astype(jnp.float32)))

    # lane-aligned stage-2 geometry
    l_pad = _round_up(max(l, 1), LANE)
    wpad = _round_up(l_pad + k - 1, LANE)
    w2 = w + 2 * padding

    # closed-form stride-1 fold: per-position window-coverage mask over the
    # (W+2p) fold grid -> count / summed-tap bias / summed-tap scale (no scatter).
    jj = jnp.arange(w2)
    kk = jnp.arange(k)
    diff = jj[:, None] - kk[None, :]
    valid = ((diff >= 0) & (diff <= l - 1)).astype(jnp.float32)          # (W2, K)
    inner = ((jj >= padding) & (jj < padding + w)).astype(jnp.float32)   # (W2,)
    cnt = jnp.sum(valid, axis=1) * inner                                 # (W2,)
    bias = jnp.einsum("ck,jk->cj", wm_norm, valid) * inner[None, :]      # (C, W2)
    scl = jnp.einsum("ck,jk->cj", wa_norm, valid) * inner[None, :]       # (C, W2)
    affine = (jnp.zeros((3, c, wpad), jnp.float32)
              .at[0, :, :w2].set(jnp.broadcast_to(cnt, (c, w2)))
              .at[1, :, :w2].set(bias)
              .at[2, :, :w2].set(scl))

    # raw polar rows in the stage-2 lane-aligned frame: (B, 2, C, Wpad)
    polar = jnp.stack([mag, ang], axis=1).astype(jnp.float32)            # (B, 2, C, W)
    right = wpad - padding - w
    polar_p = jnp.pad(polar, ((0, 0), (0, 0), (0, 0), (padding, right)))

    # batch rows per grid step: amortize ~0.35 us/step overhead on tiny rows,
    # keep >= 2 grid steps (v7x has 2 TensorCores), cap the static unroll.
    row_bytes = (2 * _round_up(c, 8) * wpad + 2 * o_pad * l_pad) * 4
    bt = max(1, min(b, (4 << 20) // max(row_bytes, 1), MAX_BT))
    if b >= 2:
        bt = min(bt, max(1, b // 2))
    b_pad = -(-b // bt) * bt
    if b_pad != b:
        polar_p = jnp.pad(polar_p, ((0, b_pad - b), (0, 0), (0, 0), (0, 0)))

    out = _wfm_stage2_pallas(polar_p, affine, w_fused, bt, l_pad)

    # crop batch / O / lane padding; output already lane-dense (B, O, L)
    real = out[:b, 0, :o, :l]
    imag = out[:b, 1, :o, :l]
    return real + 1j * imag               # == .squeeze() of (B, O, 1, L)


# ----------------------------------------------------------------------------
# main
# ----------------------------------------------------------------------------
if __name__ == "__main__":
    B, C_IN, C_OUT, W, K, STRIDE, PAD = 2, 4, 3, 16, 3, 1, 0

    key = jax.random.PRNGKey(0)
    k_re, k_im, k1, k2, k3, k4 = jax.random.split(key, 6)

    # deterministic parameters (torch.rand -> uniform [0, 1))
    params = dict(
        weight_matrix_mag=jax.random.uniform(k1, (C_IN, K), jnp.float32),
        weight_matrix_ang=jax.random.uniform(k2, (C_IN, K), jnp.float32),
        weight_matrix_ang1=jax.random.uniform(k3, (C_IN, K), jnp.float32),
        weight_matrix_ang2=jax.random.uniform(k4, (C_OUT, C_IN), jnp.float32),
    )

    # complex-valued input, (B, C, W)
    x = (jax.random.normal(k_re, (B, C_IN, W), jnp.float32)
         + 1j * jax.random.normal(k_im, (B, C_IN, W), jnp.float32)).astype(jnp.complex64)

    fwd = jax.jit(functools.partial(wfm_conv1d_forward,
                                    kernel_size=K, stride=STRIDE, padding=PAD))
    out = jax.block_until_ready(fwd(x, params))

    ref = wfm_conv1d_reference(x, params, K, STRIDE, PAD)
    np.testing.assert_allclose(np.asarray(out), np.asarray(ref), rtol=1e-4, atol=1e-4)

    L_OUT = (W + 2 * PAD - K) // STRIDE + 1
    assert out.shape == (B, C_OUT, L_OUT)
    assert out.dtype == jnp.complex64
    print("KERNEL_OK")
</pallas_src>

<mosaic_0001>
module attributes {stable_mosaic.version = 11 : i64} {
  func.func @_wfm_kernel(%arg0: i32, %arg1: memref<1x2x4x256xf32, #tpu.memory_space<vmem>>, %arg2: memref<3x4x256xf32, #tpu.memory_space<vmem>>, %arg3: memref<2x8x12xf32, #tpu.memory_space<vmem>>, %arg4: memref<1x2x8x128xf32, #tpu.memory_space<vmem>>) attributes {dimension_semantics = [#tpu.dimension_semantics<parallel>], iteration_bounds = array<i64: 2>, scalar_prefetch = 0 : i64, scratch_operands = 0 : i64, tpu.core_type = #tpu.core_type<tc>, window_params = [{transform_indices = @transform_0, window_bounds = array<i64: 1, 2, 4, 256>}, {pipeline_mode = #tpu.pipeline_mode<synchronous>, transform_indices = @transform_1, window_bounds = array<i64: 3, 4, 256>}, {pipeline_mode = #tpu.pipeline_mode<synchronous>, transform_indices = @transform_2, window_bounds = array<i64: 2, 8, 12>}, {transform_indices = @transform_3, window_bounds = array<i64: 1, 2, 8, 128>}]} {
    %c0 = arith.constant 0 : index
    %c0_0 = arith.constant 0 : index
    %c0_1 = arith.constant 0 : index
    %0 = vector.load %arg2[%c0, %c0_0, %c0_1] : memref<3x4x256xf32, #tpu.memory_space<vmem>>, vector<1x4x256xf32>
    %1 = vector.shape_cast %0 : vector<1x4x256xf32> to vector<4x256xf32>
    %c1 = arith.constant 1 : index
    %c0_2 = arith.constant 0 : index
    %c0_3 = arith.constant 0 : index
    %2 = vector.load %arg2[%c1, %c0_2, %c0_3] : memref<3x4x256xf32, #tpu.memory_space<vmem>>, vector<1x4x256xf32>
    %3 = vector.shape_cast %2 : vector<1x4x256xf32> to vector<4x256xf32>
    %c2 = arith.constant 2 : index
    %c0_4 = arith.constant 0 : index
    %c0_5 = arith.constant 0 : index
    %4 = vector.load %arg2[%c2, %c0_4, %c0_5] : memref<3x4x256xf32, #tpu.memory_space<vmem>>, vector<1x4x256xf32>
    %5 = vector.shape_cast %4 : vector<1x4x256xf32> to vector<4x256xf32>
    %c0_6 = arith.constant 0 : index
    %c0_7 = arith.constant 0 : index
    %c0_8 = arith.constant 0 : index
    %6 = vector.load %arg3[%c0_6, %c0_7, %c0_8] : memref<2x8x12xf32, #tpu.memory_space<vmem>>, vector<1x8x12xf32>
    %7 = vector.shape_cast %6 : vector<1x8x12xf32> to vector<8x12xf32>
    %c1_9 = arith.constant 1 : index
    %c0_10 = arith.constant 0 : index
    %c0_11 = arith.constant 0 : index
    %8 = vector.load %arg3[%c1_9, %c0_10, %c0_11] : memref<2x8x12xf32, #tpu.memory_space<vmem>>, vector<1x8x12xf32>
    %9 = vector.shape_cast %8 : vector<1x8x12xf32> to vector<8x12xf32>
    %c0_12 = arith.constant 0 : index
    %c0_13 = arith.constant 0 : index
    %c0_14 = arith.constant 0 : index
    %c0_15 = arith.constant 0 : index
    %10 = vector.load %arg1[%c0_12, %c0_13, %c0_14, %c0_15] : memref<1x2x4x256xf32, #tpu.memory_space<vmem>>, vector<1x1x4x256xf32>
    %11 = vector.shape_cast %10 : vector<1x1x4x256xf32> to vector<4x256xf32>
    %12 = arith.mulf %1, %11 : vector<4x256xf32>
    %13 = arith.addf %12, %3 : vector<4x256xf32>
    %c0_16 = arith.constant 0 : index
    %c1_17 = arith.constant 1 : index
    %c0_18 = arith.constant 0 : index
    %c0_19 = arith.constant 0 : index
    %14 = vector.load %arg1[%c0_16, %c1_17, %c0_18, %c0_19] : memref<1x2x4x256xf32, #tpu.memory_space<vmem>>, vector<1x1x4x256xf32>
    %15 = vector.shape_cast %14 : vector<1x1x4x256xf32> to vector<4x256xf32>
    %16 = arith.mulf %5, %15 : vector<4x256xf32>
    %cst = arith.constant 9.99999974E-6 : f32
    %17 = vector.broadcast %cst : f32 to vector<4x256xf32>
    %18 = arith.addf %13, %17 : vector<4x256xf32>
    %19 = math.log %18 : vector<4x256xf32>
    %20 = vector.extract_strided_slice %19 {offsets = [0, 0], sizes = [4, 128], strides = [1, 1]} : vector<4x256xf32> to vector<4x128xf32>
    %21 = vector.extract_strided_slice %16 {offsets = [0, 0], sizes = [4, 128], strides = [1, 1]} : vector<4x256xf32> to vector<4x128xf32>
    %c255_i32 = arith.constant 255 : i32
    %22 = tpu.dynamic_rotate %19 by %c255_i32 dim 1 : vector<4x256xf32>, i32 -> vector<4x256xf32>
    %23 = vector.extract_strided_slice %22 {offsets = [0, 0], sizes = [4, 128], strides = [1, 1]} : vector<4x256xf32> to vector<4x128xf32>
    %c255_i32_20 = arith.constant 255 : i32
    %24 = tpu.dynamic_rotate %16 by %c255_i32_20 dim 1 : vector<4x256xf32>, i32 -> vector<4x256xf32>
    %25 = vector.extract_strided_slice %24 {offsets = [0, 0], sizes = [4, 128], strides = [1, 1]} : vector<4x256xf32> to vector<4x128xf32>
    %c254_i32 = arith.constant 254 : i32
    %26 = tpu.dynamic_rotate %19 by %c254_i32 dim 1 : vector<4x256xf32>, i32 -> vector<4x256xf32>
    %27 = vector.extract_strided_slice %26 {offsets = [0, 0], sizes = [4, 128], strides = [1, 1]} : vector<4x256xf32> to vector<4x128xf32>
    %c254_i32_21 = arith.constant 254 : i32
    %28 = tpu.dynamic_rotate %16 by %c254_i32_21 dim 1 : vector<4x256xf32>, i32 -> vector<4x256xf32>
    %29 = vector.extract_strided_slice %28 {offsets = [0, 0], sizes = [4, 128], strides = [1, 1]} : vector<4x256xf32> to vector<4x128xf32>
    %30 = tpu.concatenate %20, %23, %27 in 0 : vector<4x128xf32>, vector<4x128xf32>, vector<4x128xf32> -> vector<12x128xf32>
    %31 = tpu.concatenate %21, %25, %29 in 0 : vector<4x128xf32>, vector<4x128xf32>, vector<4x128xf32> -> vector<12x128xf32>
    %cst_22 = arith.constant dense<0.000000e+00> : vector<8x128xf32>
    %32 = tpu.matmul %7, %30, %cst_22 {dimension_numbers = #tpu.dot_dimension_numbers<[1], [0], [0], [1], [0, 0, 1, 1], [], []>} : vector<8x12xf32>, vector<12x128xf32>, vector<8x128xf32> -> vector<8x128xf32>
    %cst_23 = arith.constant dense<0.000000e+00> : vector<8x128xf32>
    %33 = tpu.matmul %9, %31, %cst_23 {dimension_numbers = #tpu.dot_dimension_numbers<[1], [0], [0], [1], [0, 0, 1, 1], [], []>} : vector<8x12xf32>, vector<12x128xf32>, vector<8x128xf32> -> vector<8x128xf32>
    %34 = math.exp %32 : vector<8x128xf32>
    %35 = math.cos %33 : vector<8x128xf32>
    %36 = arith.mulf %34, %35 : vector<8x128xf32>
    %c0_24 = arith.constant 0 : index
    %c0_25 = arith.constant 0 : index
    %c0_26 = arith.constant 0 : index
    %c0_27 = arith.constant 0 : index
    %37 = vector.load %arg4[%c0_24, %c0_25, %c0_26, %c0_27] : memref<1x2x8x128xf32, #tpu.memory_space<vmem>>, vector<1x1x8x128xf32>
    %38 = vector.shape_cast %37 : vector<1x1x8x128xf32> to vector<8x128xf32>
    %39 = vector.shape_cast %36 : vector<8x128xf32> to vector<1x1x8x128xf32>
    tpu.vector_store %arg4[%c0_24, %c0_25, %c0_26, %c0_27], %39 {strides = array<i32>} : memref<1x2x8x128xf32, #tpu.memory_space<vmem>>, vector<1x1x8x128xf32>,
    %40 = math.sin %33 : vector<8x128xf32>
    %41 = arith.mulf %34, %40 : vector<8x128xf32>
    %c0_28 = arith.constant 0 : index
    %c1_29 = arith.constant 1 : index
    %c0_30 = arith.constant 0 : index
    %c0_31 = arith.constant 0 : index
    %42 = vector.load %arg4[%c0_28, %c1_29, %c0_30, %c0_31] : memref<1x2x8x128xf32, #tpu.memory_space<vmem>>, vector<1x1x8x128xf32>
    %43 = vector.shape_cast %42 : vector<1x1x8x128xf32> to vector<8x128xf32>
    %44 = vector.shape_cast %41 : vector<8x128xf32> to vector<1x1x8x128xf32>
    tpu.vector_store %arg4[%c0_28, %c1_29, %c0_30, %c0_31], %44 {strides = array<i32>} : memref<1x2x8x128xf32, #tpu.memory_space<vmem>>, vector<1x1x8x128xf32>,
    return
  }
  func.func @transform_0(%arg0: i32) -> (i32, i32, i32, i32) {
    %c0_i32 = arith.constant 0 : i32
    %c0_i32_0 = arith.constant 0 : i32
    %c0_i32_1 = arith.constant 0 : i32
    %c0_i32_2 = arith.constant 0 : i32
    return %arg0, %c0_i32, %c0_i32_0, %c0_i32_1 : i32, i32, i32, i32
  }
  func.func @transform_1(%arg0: i32) -> (i32, i32, i32) {
    %c0_i32 = arith.constant 0 : i32
    %c0_i32_0 = arith.constant 0 : i32
    %c0_i32_1 = arith.constant 0 : i32
    %c0_i32_2 = arith.constant 0 : i32
    return %c0_i32, %c0_i32_0, %c0_i32_1 : i32, i32, i32
  }
  func.func @transform_2(%arg0: i32) -> (i32, i32, i32) {
    %c0_i32 = arith.constant 0 : i32
    %c0_i32_0 = arith.constant 0 : i32
    %c0_i32_1 = arith.constant 0 : i32
    %c0_i32_2 = arith.constant 0 : i32
    return %c0_i32, %c0_i32_0, %c0_i32_1 : i32, i32, i32
  }
  func.func @transform_3(%arg0: i32) -> (i32, i32, i32, i32) {
    %c0_i32 = arith.constant 0 : i32
    %c0_i32_0 = arith.constant 0 : i32
    %c0_i32_1 = arith.constant 0 : i32
    %c0_i32_2 = arith.constant 0 : i32
    return %arg0, %c0_i32, %c0_i32_0, %c0_i32_1 : i32, i32, i32, i32
  }
}

</mosaic_0001>

<llo_original>
// kernel: custom-call.1
$region0: #{custom-call.1}
  %s0 = inlined_call_operand.hbm [shape: c64[2,4,16], index: 0, kind: input, shape index: {}]
  %s1 = inlined_call_operand.vmem [shape: f32[2,4,16], index: 1, kind: output, shape index: {}]
  %s2 = scalar_lea.hbm %s0, 8
  $region1: #{custom-call.1} parent=0
    #allocation0 [shape = 's32[1]{0}', space=sflag, size = 0x4, scoped, tag = 'scoped memory for custom-call.1']
    %3 = vsyncpa [#allocation0], 0
    %s5 = sshll.u32 %s2, 4
    %s6 = int_to_ptr.hbm [resolvable:$true] %s5
    %s7 = sshll.u32 %s1, 4
    %s8 = int_to_ptr.vmem [resolvable:$true] %s7
    %10 = dma.hbm_to_vmem [thread:$0]  %s6, 128, %s8, [#allocation0]
    %12 = dma.done [#allocation0], 128
    %13 = vsyncpa [#allocation0], 1

// kernel: custom-call
$region0: #{custom-call}
  %s0 = inlined_call_operand.hbm [shape: c64[2,4,16], index: 0, kind: input, shape index: {}]
  %s1 = inlined_call_operand.vmem [shape: f32[2,4,16], index: 1, kind: output, shape index: {}]
  $region1: #{custom-call} parent=0
    #allocation0 [shape = 's32[1]{0}', space=sflag, size = 0x4, scoped, tag = 'scoped memory for custom-call']
    %2 = vsyncpa [#allocation0], 0
    %s4 = sshll.u32 %s0, 4
    %s5 = int_to_ptr.hbm [resolvable:$true] %s4
    %s6 = sshll.u32 %s1, 4
    %s7 = int_to_ptr.vmem [resolvable:$true] %s6
    %9 = dma.hbm_to_vmem [thread:$0]  %s5, 128, %s7, [#allocation0]
    %11 = dma.done [#allocation0], 128
    %12 = vsyncpa [#allocation0], 1

// kernel: custom-call.2
$region0: #{custom-call.2}
  %s0 = inlined_call_operand.vmem [shape: f32[2,3,14], index: 0, kind: input, shape index: {}]
  %s1 = inlined_call_operand.vmem [shape: f32[2,3,14], index: 1, kind: input, shape index: {}]
  %s2 = inlined_call_operand.hbm [shape: c64[2,3,14], index: 2, kind: output, shape index: {}]
  %s3 = scalar_lea.hbm %s2, 6
  $region1: #{custom-call.2} parent=0
    #allocation0 [shape = 's32[1]{0}', space=sflag, size = 0x4, scoped, tag = 'scoped memory for custom-call.2']
    %4 = vsyncpa [#allocation0], 0
    %s6 = sshll.u32 %s0, 4
    %s7 = int_to_ptr.vmem [resolvable:$true] %s6
    %s8 = sshll.u32 %s2, 4
    %s9 = int_to_ptr.hbm [resolvable:$true] %s8
    %11 = dma.vmem_to_hbm [thread:$0]  %s7, 96, %s9, [#allocation0]
    %13 = dma.done [#allocation0], 96
    %14 = vsyncpa [#allocation0], 1
  $region2: #{custom-call.2} parent=0
    #allocation1 [shape = 's32[1]{0}', space=sflag, size = 0x4, scoped, tag = 'scoped memory for custom-call.2']
    %15 = vsyncpa [#allocation1], 0
    %s17 = sshll.u32 %s1, 4
    %s18 = int_to_ptr.vmem [resolvable:$true] %s17
    %s19 = sshll.u32 %s3, 4
    %s20 = int_to_ptr.hbm [resolvable:$true] %s19
    %22 = dma.vmem_to_hbm [thread:$0]  %s18, 96, %s20, [#allocation1]
    %24 = dma.done [#allocation1], 96
    %25 = vsyncpa [#allocation1], 1

// kernel: wfm_conv1d_forward.1
$region0: #{wfm_conv1d_forward.1}
  #allocation0 [shape = 'u32[]', space=smem, size = 0x4, offset = 0x4, fixed_abs, tag = 'smem constant byte address 0x4 - core index']
  #allocation1 [shape = 'u32[72,128]{1,0:T(1,128)}', space=vmem, size = 0x9000, scoped, tag = 'internal scratch']
  %s0 = inlined_call_operand.vmem [shape: f32[2,2,4,256], index: 0, kind: input, shape index: {}]
  %s1 = inlined_call_operand.vmem [shape: f32[3,4,256], index: 1, kind: input, shape index: {}]
  %s2 = inlined_call_operand.vmem [shape: f32[2,8,12], index: 2, kind: input, shape index: {}]
  %s3 = inlined_call_operand.vmem [shape: f32[2,2,8,128], index: 3, kind: output, shape index: {}]
  %s4 = sld [smem:[#allocation0]]
  $region45: #{wfm_conv1d_forward.1} parent=0
    _
  %s6 = ssub.s32 1, %s4
  %s7 = scalar_select 0, %s6, %s4
  loop: start=0, step=1, limit=4
  $region2: #{wfm_conv1d_forward.1} parent=0 // loop_pre_header
    _
  $region3: #{wfm_conv1d_forward.1} parent=0 // loop_header
    %s9 = sphi 0, %s13
    %p10 = scmp.ge.s32.totalorder %s9, 4
    %s19 = sphi 0, %s21
    %s22 = sphi 0, %s19
    %s23 = sphi 0, %s22
    %s39 = sphi 0, %s23
    %s43 = sphi 0, %s43
    %s45 = sphi 0, %s43
    %s46 = sphi 0, %s45
    %s60 = sphi 0, %s46
    %s64 = sphi 0, %s64
    %s66 = sphi 0, %s64
    %s67 = sphi 0, %s66
    %s81 = sphi 0, %s67
    %s87 = sphi 0, %s89
    %s90 = sphi 0, %s87
    %s91 = sphi 0, %s90
    %s107 = sphi 0, %s91
  $region4: #{wfm_conv1d_forward.1} parent=0 // loop_header_branch
    %12 = sbr.rel (%p10) target = $region8
  $region5: #{wfm_conv1d_forward.1} parent=0 // loop_body
    %s14 = ssub.s32 %s9, 1
    %s15 = ssub.s32 %s9, 2
    %s16 = sadd.s32 %s9, 1
    %s17 = ssub.s32 %s9, %s16
    %p18 = scmp.eq.s32.totalorder %s17, 0
    %s20 = sadd.s32 %s19, 1
    %s21 = scalar_select %p18, %s19, %s20
    %p24 = pneg %p18
    %p25 = scmp.eq.s32.totalorder %s9, 1
    %p26 = por %p24, %p25
    %p27 = scmp.ne.s32.totalorder %s19, %s22
    %p28 = scmp.eq.s32.totalorder %s9, 0
    %p29 = por %p27, %p28
    %p30 = scmp.ne.s32.totalorder %s19, %s22
    %p31 = scmp.eq.s32.totalorder %s14, 1
    %p32 = por %p30, %p31
    %p33 = scmp.ne.s32.totalorder %s22, %s23
    %p34 = scmp.eq.s32.totalorder %s14, 0
    %p35 = por %p33, %p34
    %p36 = scmp.ne.s32.totalorder %s22, %s23
    %p37 = scmp.eq.s32.totalorder %s15, 1
    %p38 = por %p36, %p37
    %p40 = scmp.ne.s32.totalorder %s23, %s39
    %p41 = scmp.eq.s32.totalorder %s15, 0
    %p42 = por %p40, %p41
    %s44 = sadd.s32 %s43, 1
    %p47 = scmp.eq.s32.totalorder %s9, 1
    %p48 = scmp.ne.s32.totalorder %s43, %s45
    %p49 = scmp.eq.s32.totalorder %s9, 0
    %p50 = por %p48, %p49
    %p51 = scmp.ne.s32.totalorder %s43, %s45
    %p52 = scmp.eq.s32.totalorder %s14, 1
    %p53 = por %p51, %p52
    %p54 = scmp.ne.s32.totalorder %s45, %s46
    %p55 = scmp.eq.s32.totalorder %s14, 0
    %p56 = por %p54, %p55
    %p57 = scmp.ne.s32.totalorder %s45, %s46
    %p58 = scmp.eq.s32.totalorder %s15, 1
    %p59 = por %p57, %p58
    %p61 = scmp.ne.s32.totalorder %s46, %s60
    %p62 = scmp.eq.s32.totalorder %s15, 0
    %p63 = por %p61, %p62
    %s65 = sadd.s32 %s64, 1
    %p68 = scmp.eq.s32.totalorder %s9, 1
    %p69 = scmp.ne.s32.totalorder %s64, %s66
    %p70 = scmp.eq.s32.totalorder %s9, 0
    %p71 = por %p69, %p70
    %p72 = scmp.ne.s32.totalorder %s64, %s66
    %p73 = scmp.eq.s32.totalorder %s14, 1
    %p74 = por %p72, %p73
    %p75 = scmp.ne.s32.totalorder %s66, %s67
    %p76 = scmp.eq.s32.totalorder %s14, 0
    %p77 = por %p75, %p76
    %p78 = scmp.ne.s32.totalorder %s66, %s67
    %p79 = scmp.eq.s32.totalorder %s15, 1
    %p80 = por %p78, %p79
    %p82 = scmp.ne.s32.totalorder %s67, %s81
    %p83 = scmp.eq.s32.totalorder %s15, 0
    %p84 = por %p82, %p83
    %s85 = ssub.s32 %s9, %s16
    %p86 = scmp.eq.s32.totalorder %s85, 0
    %s88 = sadd.s32 %s87, 1
    %s89 = scalar_select %p86, %s87, %s88
    %p92 = pneg %p86
    %p93 = scmp.eq.s32.totalorder %s9, 1
    %p94 = por %p92, %p93
    %p95 = scmp.ne.s32.totalorder %s87, %s90
    %p96 = scmp.eq.s32.totalorder %s9, 0
    %p97 = por %p95, %p96
    %p98 = scmp.ne.s32.totalorder %s87, %s90
    %p99 = scmp.eq.s32.totalorder %s14, 1
    %p100 = por %p98, %p99
    %p101 = scmp.ne.s32.totalorder %s90, %s91
    %p102 = scmp.eq.s32.totalorder %s14, 0
    %p103 = por %p101, %p102
    %p104 = scmp.ne.s32.totalorder %s90, %s91
    %p105 = scmp.eq.s32.totalorder %s15, 1
    %p106 = por %p104, %p105
    %p108 = scmp.ne.s32.totalorder %s91, %s107
    %p109 = scmp.eq.s32.totalorder %s15, 0
    %p110 = por %p108, %p109
    %p111 = scmp.le.s32.totalorder 1, %s9
    %p112 = scmp.lt.s32.totalorder %s9, 3
    %p113 = pnand %p111, %p112
    %p114 = pneg %p113
    // Predicated region
    $region9: #{wfm_conv1d_forward.1} parent=5 // pred_check
      _
    $region10: #{wfm_conv1d_forward.1} parent=5 // pred_check_branch
      %116 = sbr.rel (%p113) target = $region12
    $region11: #{wfm_conv1d_forward.1} parent=5 // pred_region
      %s117 = ssub.s32 %s9, 1
      // Predicated region
      $region13: #{wfm_conv1d_forward.1} parent=11 // pred_check
        %p118 = pneg %p56
      $region14: #{wfm_conv1d_forward.1} parent=11 // pred_check_branch
        %120 = sbr.rel (%p118) target = $region16
      $region15: #{wfm_conv1d_forward.1} parent=11 // pred_region
        _
      $region16: #{wfm_conv1d_forward.1} parent=11 // pred_fallthru
        _
      // Predicated region
      $region17: #{wfm_conv1d_forward.1} parent=11 // pred_check
        %p121 = pneg %p77
      $region18: #{wfm_conv1d_forward.1} parent=11 // pred_check_branch
        %123 = sbr.rel (%p121) target = $region20
      $region19: #{wfm_conv1d_forward.1} parent=11 // pred_region
        _
      $region20: #{wfm_conv1d_forward.1} parent=11 // pred_fallthru
        _
    $region12: #{wfm_conv1d_forward.1} parent=5 // pred_fallthru
      _
    %p124 = scmp.lt.s32.totalorder %s9, 2
    // Predicated region
    $region21: #{wfm_conv1d_forward.1} parent=5 // pred_check
      %p125 = pneg %p124
    $region22: #{wfm_conv1d_forward.1} parent=5 // pred_check_branch
      %127 = sbr.rel (%p125) target = $region24
    $region23: #{wfm_conv1d_forward.1} parent=5 // pred_region
      // Predicated region
      $region25: #{wfm_conv1d_forward.1} parent=23 // pred_check
        %p128 = pneg %p29
      $region26: #{wfm_conv1d_forward.1} parent=23 // pred_check_branch
        %130 = sbr.rel (%p128) target = $region28
      $region27: #{wfm_conv1d_forward.1} parent=23 // pred_region
        %p131 = scmp.lt.s32.totalorder %s9, 1
        %s132 = scalar_select %p131, %s9, 1
        %s133 = smul.addr %s132, 4
        %s134 = smul.addr %s133, 4
        %s135 = scalar_lea.vmem %s0, %s134
      $region28: #{wfm_conv1d_forward.1} parent=23 // pred_fallthru
        _
    $region24: #{wfm_conv1d_forward.1} parent=5 // pred_fallthru
      _
    %p136 = scmp.le.s32.totalorder 1, %s9
    %p137 = scmp.lt.s32.totalorder %s9, 3
    %p138 = pnand %p136, %p137
    %p139 = pneg %p138
    // Predicated region
    $region29: #{wfm_conv1d_forward.1} parent=5 // pred_check
      _
    $region30: #{wfm_conv1d_forward.1} parent=5 // pred_check_branch
      %141 = sbr.rel (%p138) target = $region32
    $region31: #{wfm_conv1d_forward.1} parent=5 // pred_region
      %s142 = ssub.s32 %s9, 1
      %p143 = scmp.lt.s32.totalorder %s14, 1
      %s144 = scalar_select %p143, %s14, 1
      %s145 = smul.addr %s144, 4
      %s146 = smul.addr %s145, 4
      %s147 = scalar_lea.vmem %s0, %s146
      %p148 = pneg %p35
      %p149 = pneg %p32
      %p150 = pneg %p56
      %p151 = pneg %p53
      %p152 = pneg %p77
      %p153 = pneg %p74
      %p154 = pneg %p103
      %p155 = pneg %p100
      %p156 = scmp.lt.s32.totalorder %s14, 1
      %s157 = scalar_select %p156, %s14, 1
      %s158 = smul.addr %s157, 2
      %s159 = smul.addr %s158, 8
      %s160 = scalar_lea.vmem %s3, %s159
      %p161 = scmp.lt.s32.totalorder %s14, 1
      %s162 = scalar_select %p161, %s14, 1
      %s163 = smul.addr %s162, 4
      %s164 = smul.addr %s163, 4
      %s165 = scalar_lea.vmem %s0, %s164
      %p166 = scmp.lt.s32.totalorder %s14, 1
      %s167 = scalar_select %p166, %s14, 1
      %s168 = smul.addr %s167, 2
      %s169 = smul.addr %s168, 8
      %s170 = scalar_lea.vmem %s3, %s169
      %v171 = vld [vmem:[%s1] sm:$0xff]
      %s172 = scalar_lea.vmem %s1, 8
      %v173 = vld [vmem:[%s172] sm:$0xff]
      %s174 = scalar_lea.vmem %s1, 16
      %v175 = vld [vmem:[%s174] sm:$0xff]
      %v176 = vld [vmem:[%s2] sm:$0xff]
      %s177 = scalar_lea.vmem %s2, 8
      %v178 = vld [vmem:[%s177] sm:$0xff]
      %v179 = vld [vmem:[%s165] sm:$0xff]
      %v180 = vmul.f32 %v171, %v179
      %v181 = vadd.f32 %v180, %v173
      %s182 = scalar_lea.vmem %s165, 8
      %v183 = vld [vmem:[%s182] sm:$0xff]
      %v184 = vmul.f32 %v175, %v183
      %v185 = vadd.f32 %v181, 1e-05
      %v186 = vlog2.pop %v185
      %v187 = vmul.f32 %v186, 0.6931472
      %189 = vst [vmem:[#allocation1] ss:$2 sm:$0xff] %v187
      %v190 = vld.sshfl [vmem:[#allocation1] sm:$0xff pattern:$0x75316420]
      %v191 = vld.sshfl [vmem:[#allocation1 + $0x8] sm:$0xff pattern:$0x75316420]
      %194 = vrot.lane.b32.xlu0 %v190, 127
      %v195 = vpop.permute.xlu0 %194
      %196 = vrot.lane.b32.xlu0 %v191, 127
      %v197 = vpop.permute.xlu0 %196
      %v198 = vlaneseq
      %v199 = vand.u32 %v198, 127
      %vm200 = vcmp.lt.s32.totalorder %v199, 127
      %v201 = vsel %vm200, %v195, %v197
      %203 = vst [vmem:[#allocation1] ss:$2 sm:$0xff] %v184
      %v204 = vld.sshfl [vmem:[#allocation1] sm:$0xff pattern:$0x75316420]
      %v205 = vld.sshfl [vmem:[#allocation1 + $0x8] sm:$0xff pattern:$0x75316420]
      %208 = vrot.lane.b32.xlu0 %v204, 127
      %v209 = vpop.permute.xlu0 %208
      %210 = vrot.lane.b32.xlu0 %v205, 127
      %v211 = vpop.permute.xlu0 %210
      %v212 = vsel %vm200, %v209, %v211
      %213 = vst [vmem:[#allocation1] ss:$2 sm:$0xff] %v187
      %v214 = vld.sshfl [vmem:[#allocation1] sm:$0xff pattern:$0x75316420]
      %v215 = vld.sshfl [vmem:[#allocation1 + $0x8] sm:$0xff pattern:$0x75316420]
      %218 = vrot.lane.b32.xlu0 %v214, 126
      %v219 = vpop.permute.xlu0 %218
      %220 = vrot.lane.b32.xlu0 %v215, 126
      %v221 = vpop.permute.xlu0 %220
      %vm222 = vcmp.lt.s32.totalorder %v199, 126
      %v223 = vsel %vm222, %v219, %v221
      %224 = vst [vmem:[#allocation1] ss:$2 sm:$0xff] %v184
      %v225 = vld.sshfl [vmem:[#allocation1] sm:$0xff pattern:$0x75316420]
      %v226 = vld.sshfl [vmem:[#allocation1 + $0x8] sm:$0xff pattern:$0x75316420]
      %229 = vrot.lane.b32.xlu0 %v225, 126
      %v230 = vpop.permute.xlu0 %229
      %231 = vrot.lane.b32.xlu0 %v226, 126
      %v232 = vpop.permute.xlu0 %231
      %v233 = vsel %vm222, %v230, %v232
      %v235 = vrot.slane %v201, 4
      %vm237 = vcmask 1043456
      %v238 = vsel %vm237, %v187, %v235
      %v240 = vrot.slane %v212, 4
      %v242 = vsel %vm237, %v184, %v240
      %vm243 = vcmask 97280
      %v245 = vsel %vm243, %v176, 0
      %v248 = vsel %vm237, %v223, 0
      %250 = vmatpush.msra.mxu0 0.0
      %251 = vmatpush.msra.mxu0 0.0
      %252 = vmatpush.msra.mxu0 0.0
      %253 = vmatpush.msra.mxu0 0.0
      %254 = vmatpush.msra.mxu0 0.0
      %255 = vmatpush.msra.mxu0 0.0
      %256 = vmatpush.msra.mxu0 0.0
      %257 = vmatpush.msra.mxu0 0.0
      %258 = vmatpush.msra.mxu0 0.0
      %259 = vmatpush.msra.mxu0 0.0
      %260 = vmatpush.msra.mxu0 0.0
      %261 = vmatpush.msra.mxu0 0.0
      %262 = vmatpush.msra.mxu0 0.0
      %263 = vmatpush.msra.mxu0 0.0
      %264 = vmatpush.msra.mxu0 %v248
      %265 = vmatpush.msra.mxu0 %v238
      %266 = vmatmul.f32.gmra.mxu0 %v245
      %v267 = vpop.f32.mrf.mxu0
      %v268 = vadd.f32 0.0, %v267
      %269 = vdwg.mxu0
      %v271 = vsel %vm243, %v178, 0
      %v274 = vsel %vm237, %v233, 0
      %276 = vmatpush.msra.mxu0 0.0
      %277 = vmatpush.msra.mxu0 0.0
      %278 = vmatpush.msra.mxu0 0.0
      %279 = vmatpush.msra.mxu0 0.0
      %280 = vmatpush.msra.mxu0 0.0
      %281 = vmatpush.msra.mxu0 0.0
      %282 = vmatpush.msra.mxu0 0.0
      %283 = vmatpush.msra.mxu0 0.0
      %284 = vmatpush.msra.mxu0 0.0
      %285 = vmatpush.msra.mxu0 0.0
      %286 = vmatpush.msra.mxu0 0.0
      %287 = vmatpush.msra.mxu0 0.0
      %288 = vmatpush.msra.mxu0 0.0
      %289 = vmatpush.msra.mxu0 0.0
      %290 = vmatpush.msra.mxu0 %v274
      %291 = vmatpush.msra.mxu0 %v242
      %292 = vmatmul.f32.gmra.mxu0 %v271
      %v293 = vpop.f32.mrf.mxu0
      %v294 = vadd.f32 0.0, %v293
      %295 = vdwg.mxu0
      %v296 = vmul.f32 %v268, 1.442695
      %v297 = vpow.pop %v296
      %v298 = vand.u32 2147483647, %v294
      %vm299 = vcmp.le.f32.partialorder %v298, 0.7853982
      %vm300 = vcmp.lt.s32.totalorder %v294, 0
      %v301 = vand.u32 %v294, 2139095040
      %v302 = vshrl.u32 %v301, 23
      %v303 = vsub.s32 %v302, 127
      %v304 = vand.u32 2147483647, %v294
      %v305 = vand.u32 %v304, 8388607
      %v306 = vor.u32 %v305, 8388608
      %v307 = vsub.s32 0, %v306
      %v308 = vadd.s32 %v303, 1
      %vm309 = vcmp.gt.s32.totalorder %v308, 0
      %v310 = vsel %vm309, %v308, 0
      %v311 = vshrl.u32 %v310, 5
      %v312 = vand.u32 %v310, 31
      %v313 = vsub.s32 32, %v312
      %v314 = vshrl.u32 683565275, %v313
      %v315 = vshll.u32 683565275, %v312
      %v316 = vshrl.u32 2475754826, %v313
      %v317 = vor.u32 %v315, %v316
      %v318 = vshll.u32 2475754826, %v312
      %v319 = vshrl.u32 2131351028, %v313
      %v320 = vor.u32 %v318, %v319
      %v321 = vshll.u32 2131351028, %v312
      %v322 = vshrl.u32 2102212464, %v313
      %v323 = vor.u32 %v321, %v322
      %v324 = vshll.u32 2102212464, %v312
      %v325 = vshrl.u32 920167782, %v313
      %v326 = vor.u32 %v324, %v325
      %v327 = vshll.u32 920167782, %v312
      %v328 = vshrl.u32 1326507024, %v313
      %v329 = vor.u32 %v327, %v328
      %vm330 = vcmp.lt.s32.totalorder %v311, 1
      %vm331 = vcmp.lt.s32.totalorder %v311, 2
      %vm332 = vcmp.lt.s32.totalorder %v311, 3
      %vm333 = vcmp.lt.s32.totalorder %v311, 4
      %v334 = vsel %vm330, %v314, %v317
      %v335 = vsel %vm333, %v323, 2102212464
      %v336 = vsel %vm332, %v320, %v335
      %v337 = vsel %vm331, %v334, %v336
      %v338 = vsel %vm330, %v317, %v320
      %v339 = vsel %vm333, %v326, 920167782
      %v340 = vsel %vm332, %v323, %v339
      %v341 = vsel %vm331, %v338, %v340
      %v342 = vsel %vm330, %v320, %v323
      %v343 = vsel %vm333, %v329, 1326507024
      %v344 = vsel %vm332, %v326, %v343
      %v345 = vsel %vm331, %v342, %v344
      %v346 = vshll.u32 %v306, 8
      %v347 = vand.u32 %v346, 65535
      %v348 = vshrl.u32 %v346, 16
      %v349 = vand.u32 %v345, 65535
      %v350 = vshrl.u32 %v345, 16
      %v351 = vmul.u32 %v347, %v349
      %v352 = vmul.u32 %v347, %v350
      %v353 = vmul.u32 %v348, %v349
      %v354 = vmul.u32 %v348, %v350
      %v355 = vshll.u32 %v352, 16
      %v356 = vshrl.u32 %v352, 16
      %v357 = vshll.u32 %v353, 16
      %v358 = vshrl.u32 %v353, 16
      %vm359 = vc.u32 %v351, %v355
      %v360 = vsel %vm359, 1, 0
      %v361 = vadd.s32 %v351, %v355
      %v362 = vadd.s32 %v354, %v360
      %vm363 = vc.u32 %v361, %v357
      %v364 = vsel %vm363, 1, 0
      %v365 = vadd.s32 %v361, %v357
      %v366 = vadd.s32 %v362, %v364
      %v367 = vadd.s32 %v366, %v356
      %v368 = vadd.s32 %v367, %v358
      %v369 = vand.u32 %v346, 65535
      %v370 = vshrl.u32 %v346, 16
      %v371 = vand.u32 %v341, 65535
      %v372 = vshrl.u32 %v341, 16
      %v373 = vmul.u32 %v369, %v371
      %v374 = vmul.u32 %v369, %v372
      %v375 = vmul.u32 %v370, %v371
      %v376 = vmul.u32 %v370, %v372
      %v377 = vshll.u32 %v374, 16
      %v378 = vshrl.u32 %v374, 16
      %v379 = vshll.u32 %v375, 16
      %v380 = vshrl.u32 %v375, 16
      %vm381 = vc.u32 %v373, %v377
      %v382 = vsel %vm381, 1, 0
      %v383 = vadd.s32 %v373, %v377
      %v384 = vadd.s32 %v376, %v382
      %vm385 = vc.u32 %v383, %v379
      %v386 = vsel %vm385, 1, 0
      %v387 = vadd.s32 %v383, %v379
      %v388 = vadd.s32 %v384, %v386
      %v389 = vadd.s32 %v388, %v378
      %v390 = vadd.s32 %v389, %v380
      %v391 = vmul.u32 %v346, %v337
      %v392 = vadd.s32 %v368, %v387
      %vm393 = vc.u32 %v368, %v387
      %v394 = vadd.s32 %v390, 1
      %v395 = vsel %vm393, %v394, %v390
      %v396 = vadd.s32 %v391, %v395
      %v397 = vadd.s32 %v396, 536870912
      %v398 = vshrl.u32 %v397, 30
      %v399 = vshll.u32 %v398, 30
      %v400 = vsub.s32 %v396, %v399
      %vm401 = vcmp.lt.s32.totalorder %v400, 0
      %v402 = vsub.s32 0, %v400
      %v403 = vsel %vm401, %v402, %v400
      %v404 = vclz %v403
      %v405 = vsub.s32 %v404, 2
      %vm406 = vcmp.gt.s32.totalorder 0, %v405
      %v407 = vsel %vm406, 0, %v405
      %v408 = vsub.s32 32, %v407
      %v409 = vshll.u32 %v400, %v407
      %v410 = vshrl.u32 %v392, %v408
      %v411 = vor.u32 %v409, %v410
      %v412 = vsub.s32 4294967266, %v407
      %v413 = vadd.s32 %v412, 127
      %v414 = vshll.u32 %v413, 23
      %v415 = vor.u32 4788187, %v414
      %v416 = vand.u32 2147483647, %v415
      %v418 = vcvt.s32.f32 %v411
      %v419 = vmul.f32 %v418, %v416
      %v420 = vxor.u32 %v419, 2147483648
      %v421 = vsel %vm300, %v420, %v419
      %v422 = vsub.s32 4, %v398
      %v423 = vsel %vm300, %v422, %v398
      %v424 = vsel %vm299, %v294, %v421
      %v425 = vsel %vm299, 0, %v423
      %v426 = vmul.f32 %v424, %v424
      %v427 = vmul.f32 %v426, -0.001358992
      %v428 = vadd.f32 %v427, 0.041655596
      %v429 = vmul.f32 %v426, %v428
      %v430 = vadd.f32 %v429, -0.4999988
      %v431 = vmul.f32 %v426, %v430
      %v432 = vadd.f32 1.0, %v431
      %v433 = vmul.f32 %v424, %v424
      %v434 = vmul.f32 %v433, -0.00019511016
      %v435 = vadd.f32 %v434, 0.008332121
      %v436 = vmul.f32 %v433, %v435
      %v437 = vadd.f32 %v436, -0.16666654
      %v438 = vmul.f32 %v433, %v437
      %v439 = vadd.f32 %v438, 1.0
      %v440 = vmul.f32 %v439, %v424
      %vm441 = vweird.f32 %v294
      %v442 = vand.u32 %v425, 3
      %vm443 = vcmp.lt.s32.totalorder %v442, 2
      %vm444 = vcmp.eq.s32.totalorder %v442, 0
      %v445 = vxor.u32 %v440, 2147483648
      %v446 = vsel %vm444, %v432, %v445
      %vm447 = vcmp.eq.s32.totalorder %v442, 2
      %v448 = vxor.u32 %v432, 2147483648
      %v449 = vsel %vm447, %v448, %v440
      %v450 = vsel %vm443, %v446, %v449
      %v451 = vsel %vm441, nan, %v450
      %v452 = vmul.f32 %v297, %v451
      %453 = vst [vmem:[%s170] sm:$0xff] %v452
      %v454 = vand.u32 2147483647, %v294
      %vm455 = vcmp.le.f32.partialorder %v454, 0.7853982
      %vm456 = vcmp.lt.s32.totalorder %v294, 0
      %v457 = vand.u32 %v294, 2139095040
      %v458 = vshrl.u32 %v457, 23
      %v459 = vsub.s32 %v458, 127
      %v460 = vand.u32 2147483647, %v294
      %v461 = vand.u32 %v460, 8388607
      %v462 = vor.u32 %v461, 8388608
      %v463 = vsub.s32 0, %v462
      %v464 = vadd.s32 %v459, 1
      %vm465 = vcmp.gt.s32.totalorder %v464, 0
      %v466 = vsel %vm465, %v464, 0
      %v467 = vshrl.u32 %v466, 5
      %v468 = vand.u32 %v466, 31
      %v469 = vsub.s32 32, %v468
      %v470 = vshrl.u32 683565275, %v469
      %v471 = vshll.u32 683565275, %v468
      %v472 = vshrl.u32 2475754826, %v469
      %v473 = vor.u32 %v471, %v472
      %v474 = vshll.u32 2475754826, %v468
      %v475 = vshrl.u32 2131351028, %v469
      %v476 = vor.u32 %v474, %v475
      %v477 = vshll.u32 2131351028, %v468
      %v478 = vshrl.u32 2102212464, %v469
      %v479 = vor.u32 %v477, %v478
      %v480 = vshll.u32 2102212464, %v468
      %v481 = vshrl.u32 920167782, %v469
      %v482 = vor.u32 %v480, %v481
      %v483 = vshll.u32 920167782, %v468
      %v484 = vshrl.u32 1326507024, %v469
      %v485 = vor.u32 %v483, %v484
      %vm486 = vcmp.lt.s32.totalorder %v467, 1
      %vm487 = vcmp.lt.s32.totalorder %v467, 2
      %vm488 = vcmp.lt.s32.totalorder %v467, 3
      %vm489 = vcmp.lt.s32.totalorder %v467, 4
      %v490 = vsel %vm486, %v470, %v473
      %v491 = vsel %vm489, %v479, 2102212464
      %v492 = vsel %vm488, %v476, %v491
      %v493 = vsel %vm487, %v490, %v492
      %v494 = vsel %vm486, %v473, %v476
      %v495 = vsel %vm489, %v482, 920167782
      %v496 = vsel %vm488, %v479, %v495
      %v497 = vsel %vm487, %v494, %v496
      %v498 = vsel %vm486, %v476, %v479
      %v499 = vsel %vm489, %v485, 1326507024
      %v500 = vsel %vm488, %v482, %v499
      %v501 = vsel %vm487, %v498, %v500
      %v502 = vshll.u32 %v462, 8
      %v503 = vand.u32 %v502, 65535
      %v504 = vshrl.u32 %v502, 16
      %v505 = vand.u32 %v501, 65535
      %v506 = vshrl.u32 %v501, 16
      %v507 = vmul.u32 %v503, %v505
      %v508 = vmul.u32 %v503, %v506
      %v509 = vmul.u32 %v504, %v505
      %v510 = vmul.u32 %v504, %v506
      %v511 = vshll.u32 %v508, 16
      %v512 = vshrl.u32 %v508, 16
      %v513 = vshll.u32 %v509, 16
      %v514 = vshrl.u32 %v509, 16
      %vm515 = vc.u32 %v507, %v511
      %v516 = vsel %vm515, 1, 0
      %v517 = vadd.s32 %v507, %v511
      %v518 = vadd.s32 %v510, %v516
      %vm519 = vc.u32 %v517, %v513
      %v520 = vsel %vm519, 1, 0
      %v521 = vadd.s32 %v517, %v513
      %v522 = vadd.s32 %v518, %v520
      %v523 = vadd.s32 %v522, %v512
      %v524 = vadd.s32 %v523, %v514
      %v525 = vand.u32 %v502, 65535
      %v526 = vshrl.u32 %v502, 16
      %v527 = vand.u32 %v497, 65535
      %v528 = vshrl.u32 %v497, 16
      %v529 = vmul.u32 %v525, %v527
      %v530 = vmul.u32 %v525, %v528
      %v531 = vmul.u32 %v526, %v527
      %v532 = vmul.u32 %v526, %v528
      %v533 = vshll.u32 %v530, 16
      %v534 = vshrl.u32 %v530, 16
      %v535 = vshll.u32 %v531, 16
      %v536 = vshrl.u32 %v531, 16
      %vm537 = vc.u32 %v529, %v533
      %v538 = vsel %vm537, 1, 0
      %v539 = vadd.s32 %v529, %v533
      %v540 = vadd.s32 %v532, %v538
      %vm541 = vc.u32 %v539, %v535
      %v542 = vsel %vm541, 1, 0
      %v543 = vadd.s32 %v539, %v535
      %v544 = vadd.s32 %v540, %v542
      %v545 = vadd.s32 %v544, %v534
      %v546 = vadd.s32 %v545, %v536
      %v547 = vmul.u32 %v502, %v493
      %v548 = vadd.s32 %v524, %v543
      %vm549 = vc.u32 %v524, %v543
      %v550 = vadd.s32 %v546, 1
      %v551 = vsel %vm549, %v550, %v546
      %v552 = vadd.s32 %v547, %v551
      %v553 = vadd.s32 %v552, 536870912
      %v554 = vshrl.u32 %v553, 30
      %v555 = vshll.u32 %v554, 30
      %v556 = vsub.s32 %v552, %v555
      %vm557 = vcmp.lt.s32.totalorder %v556, 0
      %v558 = vsub.s32 0, %v556
      %v559 = vsel %vm557, %v558, %v556
      %v560 = vclz %v559
      %v561 = vsub.s32 %v560, 2
      %vm562 = vcmp.gt.s32.totalorder 0, %v561
      %v563 = vsel %vm562, 0, %v561
      %v564 = vsub.s32 32, %v563
      %v565 = vshll.u32 %v556, %v563
      %v566 = vshrl.u32 %v548, %v564
      %v567 = vor.u32 %v565, %v566
      %v568 = vsub.s32 4294967266, %v563
      %v569 = vadd.s32 %v568, 127
      %v570 = vshll.u32 %v569, 23
      %v571 = vor.u32 4788187, %v570
      %v572 = vand.u32 2147483647, %v571
      %v574 = vcvt.s32.f32 %v567
      %v575 = vmul.f32 %v574, %v572
      %v576 = vxor.u32 %v575, 2147483648
      %v577 = vsel %vm456, %v576, %v575
      %v578 = vsub.s32 4, %v554
      %v579 = vsel %vm456, %v578, %v554
      %v580 = vsel %vm455, %v294, %v577
      %v581 = vsel %vm455, 0, %v579
      %v582 = vmul.f32 %v580, %v580
      %v583 = vmul.f32 %v582, -0.001358992
      %v584 = vadd.f32 %v583, 0.041655596
      %v585 = vmul.f32 %v582, %v584
      %v586 = vadd.f32 %v585, -0.4999988
      %v587 = vmul.f32 %v582, %v586
      %v588 = vadd.f32 1.0, %v587
      %v589 = vmul.f32 %v580, %v580
      %v590 = vmul.f32 %v589, -0.00019511016
      %v591 = vadd.f32 %v590, 0.008332121
      %v592 = vmul.f32 %v589, %v591
      %v593 = vadd.f32 %v592, -0.16666654
      %v594 = vmul.f32 %v589, %v593
      %v595 = vadd.f32 %v594, 1.0
      %v596 = vmul.f32 %v595, %v580
      %vm597 = vweird.f32 %v294
      %v598 = vadd.s32 %v581, 3
      %v599 = vand.u32 %v598, 3
      %vm600 = vcmp.lt.s32.totalorder %v599, 2
      %vm601 = vcmp.eq.s32.totalorder %v599, 0
      %v602 = vxor.u32 %v596, 2147483648
      %v603 = vsel %vm601, %v588, %v602
      %vm604 = vcmp.eq.s32.totalorder %v599, 2
      %v605 = vxor.u32 %v588, 2147483648
      %v606 = vsel %vm604, %v605, %v596
      %v607 = vsel %vm600, %v603, %v606
      %v608 = vsel %vm597, nan, %v607
      %v609 = vmul.f32 %v297, %v608
      %s610 = scalar_lea.vmem %s170, 8
      %611 = vst [vmem:[%s610] sm:$0xff] %v609
      %p612 = scmp.lt.s32.totalorder %s14, 1
      %s613 = scalar_select %p612, %s14, 1
      %s614 = smul.addr %s613, 2
      %s615 = smul.addr %s614, 8
      %s616 = scalar_lea.vmem %s3, %s615
      // Predicated region
      $region33: #{wfm_conv1d_forward.1} parent=31 // pred_check
        %p617 = pneg %p100
      $region34: #{wfm_conv1d_forward.1} parent=31 // pred_check_branch
        %619 = sbr.rel (%p617) target = $region36
      $region35: #{wfm_conv1d_forward.1} parent=31 // pred_region
        _
      $region36: #{wfm_conv1d_forward.1} parent=31 // pred_fallthru
        _
    $region32: #{wfm_conv1d_forward.1} parent=5 // pred_fallthru
      _
    %p620 = scmp.le.s32.totalorder 2, %s9
    // Predicated region
    $region37: #{wfm_conv1d_forward.1} parent=5 // pred_check
      %p621 = pneg %p620
    $region38: #{wfm_conv1d_forward.1} parent=5 // pred_check_branch
      %623 = sbr.rel (%p621) target = $region40
    $region39: #{wfm_conv1d_forward.1} parent=5 // pred_region
      %s624 = ssub.s32 %s9, 2
      // Predicated region
      $region41: #{wfm_conv1d_forward.1} parent=39 // pred_check
        %p625 = pneg %p106
      $region42: #{wfm_conv1d_forward.1} parent=39 // pred_check_branch
        %627 = sbr.rel (%p625) target = $region44
      $region43: #{wfm_conv1d_forward.1} parent=39 // pred_region
        %p628 = scmp.lt.s32.totalorder %s15, 1
        %s629 = scalar_select %p628, %s15, 1
        %s630 = smul.addr %s629, 2
        %s631 = smul.addr %s630, 8
        %s632 = scalar_lea.vmem %s3, %s631
      $region44: #{wfm_conv1d_forward.1} parent=39 // pred_fallthru
        _
    $region40: #{wfm_conv1d_forward.1} parent=5 // pred_fallthru
      _
  $region6: #{wfm_conv1d_forward.1} parent=0 // loop_footer
    %s13 = sadd.s32 1, %s9
  $region7: #{wfm_conv1d_forward.1} parent=0 // loop_footer_branch
    %8 = sbr.rel target = $region3
  $region8: #{wfm_conv1d_forward.1} parent=0 // loop_exit
    _

</llo_original>
